<compile_context>
chip_gen: v7x
topology: tpu7x:2x2x1
jax: 0.10.0
libtpu: 0.0.40
codegen_flags: <defaults>
</compile_context>

<pallas_src>
import functools

import jax
import jax.numpy as jnp
from jax.experimental import pallas as pl
from jax.experimental.pallas import tpu as pltpu


def _leaky_relu(x, slope=0.1):
    # slope < 1  =>  max(x, slope*x) == leaky_relu(x)
    return jnp.maximum(x, slope * x)


def sft_kernel(feat_ref, cond_ref, w0_ref, b0_ref, w1_ref, b1_ref, out_ref,
               *, out_nc):
    """One (batch, pixel-tile) grid step.

    feat_ref: (1, out_nc, tp) f32     cond_ref: (1, in_nc, tp) f32
    w0_ref:   (2*nf, in_nc)   bf16    b0_ref:   (2*nf, 1)      f32
    w1_ref:   (2*out_nc, 2*nf) bf16   b1_ref:   (2*out_nc, 1)  f32 (+1 folded
                                                                into scale bias)
    out_ref:  (1, out_nc, tp) f32
    """
    cond = cond_ref[0].astype(jnp.bfloat16)                     # (in_nc, tp)

    # fused first 1x1 conv of both branches (pixels on lanes), bf16 MXU, f32 acc
    h = jnp.dot(w0_ref[...], cond,
                preferred_element_type=jnp.float32) + b0_ref[...]
    # leaky relu, then bf16 for the second matmul (halves the VMEM slab)
    h = _leaky_relu(h, 0.1).astype(jnp.bfloat16)

    # fused second 1x1 conv: block-diagonal weight -> [scale+1 ; shift]
    y = jnp.dot(w1_ref[...], h,
                preferred_element_type=jnp.float32) + b1_ref[...]

    out_ref[0] = feat_ref[0] * y[:out_nc, :] + y[out_nc:, :]


@functools.partial(jax.jit, static_argnames=("tm", "core_parallel"))
def sft_layer(feat_nchw, cond_nchw, params, *, tm=8192, core_parallel=False):
    """feat_nchw: (B, out_nc, H, W), cond_nchw: (B, in_nc, H, W). f32 in/out.

    Set core_parallel=True on v7x (2 TensorCores/chip) to shard the pixel-tile
    grid axis across both cores; harmless to leave False elsewhere.
    """
    ws0, bs0, ws1, bs1, wh0, bh0, wh1, bh1 = params
    B, out_nc, H, W = feat_nchw.shape
    in_nc = cond_nchw.shape[1]
    nf = ws0.shape[0]
    P = H * W

    # ---- pack fused weights (tiny arrays, negligible cost) ----
    # bf16 weights pin single-pass MXU lowering regardless of the ambient
    # default_matmul_precision; biases stay f32 (added post-accumulation).
    w0 = jnp.concatenate([ws0, wh0], axis=0).astype(jnp.bfloat16)   # (2nf, in_nc)
    b0 = jnp.concatenate([bs0, bh0], axis=0)[:, None]               # (2nf, 1) f32
    zblk = jnp.zeros((out_nc, nf), ws1.dtype)
    w1 = jnp.concatenate(
        [jnp.concatenate([ws1, zblk], axis=1),
         jnp.concatenate([zblk, wh1], axis=1)],
        axis=0).astype(jnp.bfloat16)                                # (2*out_nc, 2nf)
    b1 = jnp.concatenate([bs1 + 1.0, bh1], axis=0)[:, None]         # (+1 folded in)

    # ---- keep NCHW: free reshape to (B, C, H*W); tile over pixel axis ----
    feat = feat_nchw.reshape(B, out_nc, P)
    cond = cond_nchw.reshape(B, in_nc, P)

    if P <= tm:
        tp = P                      # full-extent last dim (always legal)
    else:
        assert tm % 128 == 0, "pixel tile must be a multiple of 128 lanes"
        tp = tm
    n_blk = pl.cdiv(P, tp)          # uneven tail handled by Pallas pad/mask

    full2d = lambda shape: pl.BlockSpec(shape, lambda b, i: (0, 0))

    pixel_sem = pltpu.CORE_PARALLEL if core_parallel else pltpu.PARALLEL

    out = pl.pallas_call(
        functools.partial(sft_kernel, out_nc=out_nc),
        out_shape=jax.ShapeDtypeStruct((B, out_nc, P), jnp.float32),
        grid_spec=pltpu.PrefetchScalarGridSpec(
            num_scalar_prefetch=0,
            grid=(B, n_blk),
            in_specs=[
                pl.BlockSpec((1, out_nc, tp), lambda b, i: (b, 0, i)),  # feat
                pl.BlockSpec((1, in_nc, tp), lambda b, i: (b, 0, i)),   # cond
                full2d((2 * nf, in_nc)),                                # fused conv0 W
                full2d((2 * nf, 1)),                                    # fused conv0 b
                full2d((2 * out_nc, 2 * nf)),                           # fused conv1 W (block-diag)
                full2d((2 * out_nc, 1)),                                # fused conv1 b (+1 folded)
            ],
            out_specs=pl.BlockSpec((1, out_nc, tp), lambda b, i: (b, 0, i)),
        ),
        compiler_params=pltpu.CompilerParams(
            dimension_semantics=(pltpu.PARALLEL, pixel_sem),
            # tp=8192 f32: double-buffered I/O ~10 MiB + bf16/f32 intermediates
            # ~8 MiB; 40 MiB leaves headroom on 64 MiB (v7x) and 128 MiB VMEM.
            vmem_limit_bytes=40 << 20),
        # If a v7x profile shows exposed input DMA at step boundaries, add
        # pipeline_mode=pl.Buffered(3) on the feat/cond BlockSpecs.
    )(feat, cond, w0, b0, w1, b1)

    return out.reshape(B, out_nc, H, W)


def init_params(key, in_nc=32, out_nc=64, nf=32):
    """Mimic nn.Conv2d default init. Weights stored PyTorch-style (C_out, C_in)."""
    ks = jax.random.split(key, 8)

    def conv(kw, kb, cin, cout):
        bound = 1.0 / (cin ** 0.5)
        w = jax.random.uniform(kw, (cout, cin), jnp.float32, -bound, bound)
        b = jax.random.uniform(kb, (cout,), jnp.float32, -bound, bound)
        return w, b

    ws0, bs0 = conv(ks[0], ks[1], in_nc, nf)
    ws1, bs1 = conv(ks[2], ks[3], nf, out_nc)
    wh0, bh0 = conv(ks[4], ks[5], in_nc, nf)
    wh1, bh1 = conv(ks[6], ks[7], nf, out_nc)
    return (ws0, bs0, ws1, bs1, wh0, bh0, wh1, bh1)


def reference(feat_nchw, cond_nchw, params):
    """Pure-JAX f32 reference of the PyTorch forward."""
    ws0, bs0, ws1, bs1, wh0, bh0, wh1, bh1 = params

    def conv1x1(x, w, b):   # x: (B, Cin, H, W), w: (Cout, Cin), b: (Cout,)
        return jnp.einsum('oc,bchw->bohw', w, x) + b[None, :, None, None]

    def lrelu(x):
        return jnp.where(x >= 0, x, 0.1 * x)

    hs = lrelu(conv1x1(cond_nchw, ws0, bs0))
    scale = conv1x1(hs, ws1, bs1)
    hh = lrelu(conv1x1(cond_nchw, wh0, bh0))
    shift = conv1x1(hh, wh1, bh1)
    return feat_nchw * (scale + 1.0) + shift


if __name__ == "__main__":
    in_nc, out_nc, nf = 32, 64, 32

    key = jax.random.PRNGKey(0)
    k_feat, k_cond, k_params, k_feat2, k_cond2 = jax.random.split(key, 5)
    params = init_params(k_params, in_nc, out_nc, nf)

    # Tolerances loosened vs f32 reference: the conv chain runs on the MXU in
    # bf16 (with f32 accumulation), which is the intended fast path.
    ATOL = RTOL = 5e-2

    # case 1: small image, single pixel tile per batch element
    B, H, W = 2, 16, 16
    feat = jax.random.normal(k_feat, (B, out_nc, H, W), jnp.float32)
    cond = jax.random.normal(k_cond, (B, in_nc, H, W), jnp.float32)
    out = jax.block_until_ready(sft_layer(feat, cond, params))
    assert out.shape == (B, out_nc, H, W)
    assert jnp.allclose(out, reference(feat, cond, params), atol=ATOL, rtol=RTOL)

    # case 2: multi-tile grid with an uneven tail (H*W = 960, tile = 512)
    B2, H2, W2 = 1, 30, 32
    feat2 = jax.random.normal(k_feat2, (B2, out_nc, H2, W2), jnp.float32)
    cond2 = jax.random.normal(k_cond2, (B2, in_nc, H2, W2), jnp.float32)
    out2 = jax.block_until_ready(sft_layer(feat2, cond2, params, tm=512))
    assert out2.shape == (B2, out_nc, H2, W2)
    assert jnp.allclose(out2, reference(feat2, cond2, params), atol=ATOL, rtol=RTOL)

    print("KERNEL_OK")
</pallas_src>

<mosaic_0001>
module attributes {stable_mosaic.version = 11 : i64} {
  func.func @sft_kernel(%arg0: i32, %arg1: i32, %arg2: memref<1x64x256xf32, #tpu.memory_space<vmem>>, %arg3: memref<1x32x256xf32, #tpu.memory_space<vmem>>, %arg4: memref<64x32xbf16, #tpu.memory_space<vmem>>, %arg5: memref<64x1xf32, #tpu.memory_space<vmem>>, %arg6: memref<128x64xbf16, #tpu.memory_space<vmem>>, %arg7: memref<128x1xf32, #tpu.memory_space<vmem>>, %arg8: memref<1x64x256xf32, #tpu.memory_space<vmem>>) attributes {dimension_semantics = [#tpu.dimension_semantics<parallel>, #tpu.dimension_semantics<parallel>], iteration_bounds = array<i64: 2, 1>, scalar_prefetch = 0 : i64, scratch_operands = 0 : i64, tpu.core_type = #tpu.core_type<tc>, window_params = [{transform_indices = @transform_0, window_bounds = array<i64: 1, 64, 256>}, {transform_indices = @transform_1, window_bounds = array<i64: 1, 32, 256>}, {pipeline_mode = #tpu.pipeline_mode<synchronous>, transform_indices = @transform_2, window_bounds = array<i64: 64, 32>}, {pipeline_mode = #tpu.pipeline_mode<synchronous>, transform_indices = @transform_3, window_bounds = array<i64: 64, 1>}, {pipeline_mode = #tpu.pipeline_mode<synchronous>, transform_indices = @transform_4, window_bounds = array<i64: 128, 64>}, {pipeline_mode = #tpu.pipeline_mode<synchronous>, transform_indices = @transform_5, window_bounds = array<i64: 128, 1>}, {transform_indices = @transform_6, window_bounds = array<i64: 1, 64, 256>}]} {
    %c0 = arith.constant 0 : index
    %c0_0 = arith.constant 0 : index
    %c0_1 = arith.constant 0 : index
    %0 = vector.load %arg3[%c0, %c0_0, %c0_1] : memref<1x32x256xf32, #tpu.memory_space<vmem>>, vector<1x32x256xf32>
    %1 = vector.shape_cast %0 : vector<1x32x256xf32> to vector<32x256xf32>
    %2 = arith.truncf %1 : vector<32x256xf32> to vector<32x256xbf16>
    %c0_2 = arith.constant 0 : index
    %c0_3 = arith.constant 0 : index
    %3 = vector.load %arg4[%c0_2, %c0_3] : memref<64x32xbf16, #tpu.memory_space<vmem>>, vector<64x32xbf16>
    %cst = arith.constant dense<0.000000e+00> : vector<64x256xf32>
    %4 = tpu.matmul %3, %2, %cst {dimension_numbers = #tpu.dot_dimension_numbers<[1], [0], [0], [1], [0, 0, 1, 1], [], []>} : vector<64x32xbf16>, vector<32x256xbf16>, vector<64x256xf32> -> vector<64x256xf32>
    %c0_4 = arith.constant 0 : index
    %c0_5 = arith.constant 0 : index
    %5 = vector.load %arg5[%c0_4, %c0_5] : memref<64x1xf32, #tpu.memory_space<vmem>>, vector<64x1xf32>
    %6 = vector.broadcast %5 : vector<64x1xf32> to vector<64x256xf32>
    %7 = arith.addf %4, %6 : vector<64x256xf32>
    %cst_6 = arith.constant 1.000000e-01 : f32
    %8 = vector.broadcast %cst_6 : f32 to vector<64x256xf32>
    %9 = arith.mulf %8, %7 : vector<64x256xf32>
    %10 = arith.maximumf %7, %9 : vector<64x256xf32>
    %11 = arith.truncf %10 : vector<64x256xf32> to vector<64x256xbf16>
    %c0_7 = arith.constant 0 : index
    %c0_8 = arith.constant 0 : index
    %12 = vector.load %arg6[%c0_7, %c0_8] : memref<128x64xbf16, #tpu.memory_space<vmem>>, vector<128x64xbf16>
    %cst_9 = arith.constant dense<0.000000e+00> : vector<128x256xf32>
    %13 = tpu.matmul %12, %11, %cst_9 {dimension_numbers = #tpu.dot_dimension_numbers<[1], [0], [0], [1], [0, 0, 1, 1], [], []>} : vector<128x64xbf16>, vector<64x256xbf16>, vector<128x256xf32> -> vector<128x256xf32>
    %c0_10 = arith.constant 0 : index
    %c0_11 = arith.constant 0 : index
    %14 = vector.load %arg7[%c0_10, %c0_11] : memref<128x1xf32, #tpu.memory_space<vmem>>, vector<128x1xf32>
    %15 = vector.broadcast %14 : vector<128x1xf32> to vector<128x256xf32>
    %16 = arith.addf %13, %15 : vector<128x256xf32>
    %c0_12 = arith.constant 0 : index
    %c0_13 = arith.constant 0 : index
    %c0_14 = arith.constant 0 : index
    %17 = vector.load %arg2[%c0_12, %c0_13, %c0_14] : memref<1x64x256xf32, #tpu.memory_space<vmem>>, vector<1x64x256xf32>
    %18 = vector.shape_cast %17 : vector<1x64x256xf32> to vector<64x256xf32>
    %19 = vector.extract_strided_slice %16 {offsets = [0, 0], sizes = [64, 256], strides = [1, 1]} : vector<128x256xf32> to vector<64x256xf32>
    %20 = arith.mulf %18, %19 : vector<64x256xf32>
    %21 = vector.extract_strided_slice %16 {offsets = [64, 0], sizes = [64, 256], strides = [1, 1]} : vector<128x256xf32> to vector<64x256xf32>
    %22 = arith.addf %20, %21 : vector<64x256xf32>
    %c0_15 = arith.constant 0 : index
    %c0_16 = arith.constant 0 : index
    %c0_17 = arith.constant 0 : index
    %23 = vector.load %arg8[%c0_15, %c0_16, %c0_17] : memref<1x64x256xf32, #tpu.memory_space<vmem>>, vector<1x64x256xf32>
    %24 = vector.shape_cast %23 : vector<1x64x256xf32> to vector<64x256xf32>
    %25 = vector.shape_cast %22 : vector<64x256xf32> to vector<1x64x256xf32>
    tpu.vector_store %arg8[%c0_15, %c0_16, %c0_17], %25 {strides = array<i32>} : memref<1x64x256xf32, #tpu.memory_space<vmem>>, vector<1x64x256xf32>,
    return
  }
  func.func @transform_0(%arg0: i32, %arg1: i32) -> (i32, i32, i32) {
    %c0_i32 = arith.constant 0 : i32
    %c0_i32_0 = arith.constant 0 : i32
    return %arg0, %c0_i32, %arg1 : i32, i32, i32
  }
  func.func @transform_1(%arg0: i32, %arg1: i32) -> (i32, i32, i32) {
    %c0_i32 = arith.constant 0 : i32
    %c0_i32_0 = arith.constant 0 : i32
    return %arg0, %c0_i32, %arg1 : i32, i32, i32
  }
  func.func @transform_2(%arg0: i32, %arg1: i32) -> (i32, i32) {
    %c0_i32 = arith.constant 0 : i32
    %c0_i32_0 = arith.constant 0 : i32
    %c0_i32_1 = arith.constant 0 : i32
    return %c0_i32, %c0_i32_0 : i32, i32
  }
  func.func @transform_3(%arg0: i32, %arg1: i32) -> (i32, i32) {
    %c0_i32 = arith.constant 0 : i32
    %c0_i32_0 = arith.constant 0 : i32
    %c0_i32_1 = arith.constant 0 : i32
    return %c0_i32, %c0_i32_0 : i32, i32
  }
  func.func @transform_4(%arg0: i32, %arg1: i32) -> (i32, i32) {
    %c0_i32 = arith.constant 0 : i32
    %c0_i32_0 = arith.constant 0 : i32
    %c0_i32_1 = arith.constant 0 : i32
    return %c0_i32, %c0_i32_0 : i32, i32
  }
  func.func @transform_5(%arg0: i32, %arg1: i32) -> (i32, i32) {
    %c0_i32 = arith.constant 0 : i32
    %c0_i32_0 = arith.constant 0 : i32
    %c0_i32_1 = arith.constant 0 : i32
    return %c0_i32, %c0_i32_0 : i32, i32
  }
  func.func @transform_6(%arg0: i32, %arg1: i32) -> (i32, i32, i32) {
    %c0_i32 = arith.constant 0 : i32
    %c0_i32_0 = arith.constant 0 : i32
    return %arg0, %c0_i32, %arg1 : i32, i32, i32
  }
}

</mosaic_0001>

<llo_original>
// kernel: sft_layer.1
$region0: #{sft_layer.1}
  #allocation0 [shape = 'u32[]', space=smem, size = 0x4, offset = 0x4, fixed_abs, tag = 'smem constant byte address 0x4 - core index']
  #allocation1 [shape = 'u32[144,128]{1,0:T(1,128)}', space=vmem, size = 0x12000, scoped, tag = 'internal scratch']
  %s0 = inlined_call_operand.vmem [shape: f32[2,64,256], index: 0, kind: input, shape index: {}]
  %s1 = inlined_call_operand.vmem [shape: f32[2,32,256], index: 1, kind: input, shape index: {}]
  %s2 = inlined_call_operand.vmem [shape: bf16[64,32], index: 2, kind: input, shape index: {}]
  %s3 = inlined_call_operand.vmem [shape: f32[64,1], index: 3, kind: input, shape index: {}]
  %s4 = inlined_call_operand.vmem [shape: bf16[128,64], index: 4, kind: input, shape index: {}]
  %s5 = inlined_call_operand.vmem [shape: f32[128,1], index: 5, kind: input, shape index: {}]
  %s6 = inlined_call_operand.vmem [shape: f32[2,64,256], index: 6, kind: output, shape index: {}]
  %s7 = sld [smem:[#allocation0]]
  $region57: #{sft_layer.1} parent=0
    _
  %s9 = ssub.s32 1, %s7
  %s10 = scalar_select 0, %s9, %s7
  loop: start=0, step=1, limit=4
  $region2: #{sft_layer.1} parent=0 // loop_pre_header
    _
  $region3: #{sft_layer.1} parent=0 // loop_header
    %s12 = sphi 0, %s16
    %p13 = scmp.ge.s32.totalorder %s12, 4
    %s19 = sphi 0, %s31
    %s20 = sphi 0, %s27
    %s21 = sphi 0, %s19
    %s22 = sphi 0, %s20
    %s23 = sphi 0, %s21
    %s24 = sphi 0, %s22
    %s36 = sphi 0, %s38
    %s39 = sphi 0, %s36
    %s40 = sphi 0, %s39
    %s56 = sphi 0, %s40
    %s64 = sphi 0, %s66
    %s67 = sphi 0, %s64
    %s68 = sphi 0, %s67
    %s84 = sphi 0, %s68
    %s88 = sphi 0, %s88
    %s90 = sphi 0, %s88
    %s91 = sphi 0, %s90
    %s105 = sphi 0, %s91
    %s109 = sphi 0, %s109
    %s111 = sphi 0, %s109
    %s112 = sphi 0, %s111
    %s126 = sphi 0, %s112
    %s130 = sphi 0, %s130
    %s132 = sphi 0, %s130
    %s133 = sphi 0, %s132
    %s147 = sphi 0, %s133
    %s151 = sphi 0, %s151
    %s153 = sphi 0, %s151
    %s154 = sphi 0, %s153
    %s168 = sphi 0, %s154
    %s176 = sphi 0, %s178
    %s179 = sphi 0, %s176
    %s180 = sphi 0, %s179
    %s196 = sphi 0, %s180
  $region4: #{sft_layer.1} parent=0 // loop_header_branch
    %15 = sbr.rel (%p13) target = $region8
  $region5: #{sft_layer.1} parent=0 // loop_body
    %s17 = ssub.s32 %s12, 1
    %s18 = ssub.s32 %s12, 2
    %s25 = sadd.s32 1, %s20
    %p26 = scmp.ge.s32.totalorder %s25, 1
    %s27 = scalar_select %p26, 0, %s25
    %s28 = sadd.s32 1, %s19
    %s29 = scalar_select %p26, %s28, %s19
    %p30 = scmp.ge.s32.totalorder %s29, 2
    %s31 = scalar_select %p30, 0, %s29
    %s32 = ssub.s32 %s19, %s31
    %s33 = ssub.s32 %s20, %s27
    %s34 = sor.u32 %s32, %s33
    %p35 = scmp.eq.s32.totalorder %s34, 0
    %s37 = sadd.s32 %s36, 1
    %s38 = scalar_select %p35, %s36, %s37
    %p41 = pneg %p35
    %p42 = scmp.eq.s32.totalorder %s12, 1
    %p43 = por %p41, %p42
    %p44 = scmp.ne.s32.totalorder %s36, %s39
    %p45 = scmp.eq.s32.totalorder %s12, 0
    %p46 = por %p44, %p45
    %p47 = scmp.ne.s32.totalorder %s36, %s39
    %p48 = scmp.eq.s32.totalorder %s17, 1
    %p49 = por %p47, %p48
    %p50 = scmp.ne.s32.totalorder %s39, %s40
    %p51 = scmp.eq.s32.totalorder %s17, 0
    %p52 = por %p50, %p51
    %p53 = scmp.ne.s32.totalorder %s39, %s40
    %p54 = scmp.eq.s32.totalorder %s18, 1
    %p55 = por %p53, %p54
    %p57 = scmp.ne.s32.totalorder %s40, %s56
    %p58 = scmp.eq.s32.totalorder %s18, 0
    %p59 = por %p57, %p58
    %s60 = ssub.s32 %s19, %s31
    %s61 = ssub.s32 %s20, %s27
    %s62 = sor.u32 %s60, %s61
    %p63 = scmp.eq.s32.totalorder %s62, 0
    %s65 = sadd.s32 %s64, 1
    %s66 = scalar_select %p63, %s64, %s65
    %p69 = pneg %p63
    %p70 = scmp.eq.s32.totalorder %s12, 1
    %p71 = por %p69, %p70
    %p72 = scmp.ne.s32.totalorder %s64, %s67
    %p73 = scmp.eq.s32.totalorder %s12, 0
    %p74 = por %p72, %p73
    %p75 = scmp.ne.s32.totalorder %s64, %s67
    %p76 = scmp.eq.s32.totalorder %s17, 1
    %p77 = por %p75, %p76
    %p78 = scmp.ne.s32.totalorder %s67, %s68
    %p79 = scmp.eq.s32.totalorder %s17, 0
    %p80 = por %p78, %p79
    %p81 = scmp.ne.s32.totalorder %s67, %s68
    %p82 = scmp.eq.s32.totalorder %s18, 1
    %p83 = por %p81, %p82
    %p85 = scmp.ne.s32.totalorder %s68, %s84
    %p86 = scmp.eq.s32.totalorder %s18, 0
    %p87 = por %p85, %p86
    %s89 = sadd.s32 %s88, 1
    %p92 = scmp.eq.s32.totalorder %s12, 1
    %p93 = scmp.ne.s32.totalorder %s88, %s90
    %p94 = scmp.eq.s32.totalorder %s12, 0
    %p95 = por %p93, %p94
    %p96 = scmp.ne.s32.totalorder %s88, %s90
    %p97 = scmp.eq.s32.totalorder %s17, 1
    %p98 = por %p96, %p97
    %p99 = scmp.ne.s32.totalorder %s90, %s91
    %p100 = scmp.eq.s32.totalorder %s17, 0
    %p101 = por %p99, %p100
    %p102 = scmp.ne.s32.totalorder %s90, %s91
    %p103 = scmp.eq.s32.totalorder %s18, 1
    %p104 = por %p102, %p103
    %p106 = scmp.ne.s32.totalorder %s91, %s105
    %p107 = scmp.eq.s32.totalorder %s18, 0
    %p108 = por %p106, %p107
    %s110 = sadd.s32 %s109, 1
    %p113 = scmp.eq.s32.totalorder %s12, 1
    %p114 = scmp.ne.s32.totalorder %s109, %s111
    %p115 = scmp.eq.s32.totalorder %s12, 0
    %p116 = por %p114, %p115
    %p117 = scmp.ne.s32.totalorder %s109, %s111
    %p118 = scmp.eq.s32.totalorder %s17, 1
    %p119 = por %p117, %p118
    %p120 = scmp.ne.s32.totalorder %s111, %s112
    %p121 = scmp.eq.s32.totalorder %s17, 0
    %p122 = por %p120, %p121
    %p123 = scmp.ne.s32.totalorder %s111, %s112
    %p124 = scmp.eq.s32.totalorder %s18, 1
    %p125 = por %p123, %p124
    %p127 = scmp.ne.s32.totalorder %s112, %s126
    %p128 = scmp.eq.s32.totalorder %s18, 0
    %p129 = por %p127, %p128
    %s131 = sadd.s32 %s130, 1
    %p134 = scmp.eq.s32.totalorder %s12, 1
    %p135 = scmp.ne.s32.totalorder %s130, %s132
    %p136 = scmp.eq.s32.totalorder %s12, 0
    %p137 = por %p135, %p136
    %p138 = scmp.ne.s32.totalorder %s130, %s132
    %p139 = scmp.eq.s32.totalorder %s17, 1
    %p140 = por %p138, %p139
    %p141 = scmp.ne.s32.totalorder %s132, %s133
    %p142 = scmp.eq.s32.totalorder %s17, 0
    %p143 = por %p141, %p142
    %p144 = scmp.ne.s32.totalorder %s132, %s133
    %p145 = scmp.eq.s32.totalorder %s18, 1
    %p146 = por %p144, %p145
    %p148 = scmp.ne.s32.totalorder %s133, %s147
    %p149 = scmp.eq.s32.totalorder %s18, 0
    %p150 = por %p148, %p149
    %s152 = sadd.s32 %s151, 1
    %p155 = scmp.eq.s32.totalorder %s12, 1
    %p156 = scmp.ne.s32.totalorder %s151, %s153
    %p157 = scmp.eq.s32.totalorder %s12, 0
    %p158 = por %p156, %p157
    %p159 = scmp.ne.s32.totalorder %s151, %s153
    %p160 = scmp.eq.s32.totalorder %s17, 1
    %p161 = por %p159, %p160
    %p162 = scmp.ne.s32.totalorder %s153, %s154
    %p163 = scmp.eq.s32.totalorder %s17, 0
    %p164 = por %p162, %p163
    %p165 = scmp.ne.s32.totalorder %s153, %s154
    %p166 = scmp.eq.s32.totalorder %s18, 1
    %p167 = por %p165, %p166
    %p169 = scmp.ne.s32.totalorder %s154, %s168
    %p170 = scmp.eq.s32.totalorder %s18, 0
    %p171 = por %p169, %p170
    %s172 = ssub.s32 %s19, %s31
    %s173 = ssub.s32 %s20, %s27
    %s174 = sor.u32 %s172, %s173
    %p175 = scmp.eq.s32.totalorder %s174, 0
    %s177 = sadd.s32 %s176, 1
    %s178 = scalar_select %p175, %s176, %s177
    %p181 = pneg %p175
    %p182 = scmp.eq.s32.totalorder %s12, 1
    %p183 = por %p181, %p182
    %p184 = scmp.ne.s32.totalorder %s176, %s179
    %p185 = scmp.eq.s32.totalorder %s12, 0
    %p186 = por %p184, %p185
    %p187 = scmp.ne.s32.totalorder %s176, %s179
    %p188 = scmp.eq.s32.totalorder %s17, 1
    %p189 = por %p187, %p188
    %p190 = scmp.ne.s32.totalorder %s179, %s180
    %p191 = scmp.eq.s32.totalorder %s17, 0
    %p192 = por %p190, %p191
    %p193 = scmp.ne.s32.totalorder %s179, %s180
    %p194 = scmp.eq.s32.totalorder %s18, 1
    %p195 = por %p193, %p194
    %p197 = scmp.ne.s32.totalorder %s180, %s196
    %p198 = scmp.eq.s32.totalorder %s18, 0
    %p199 = por %p197, %p198
    %p200 = scmp.le.s32.totalorder 1, %s12
    %p201 = scmp.lt.s32.totalorder %s12, 3
    %p202 = pnand %p200, %p201
    %p203 = pneg %p202
    // Predicated region
    $region9: #{sft_layer.1} parent=5 // pred_check
      _
    $region10: #{sft_layer.1} parent=5 // pred_check_branch
      %205 = sbr.rel (%p202) target = $region12
    $region11: #{sft_layer.1} parent=5 // pred_region
      %s206 = ssub.s32 %s12, 1
      // Predicated region
      $region13: #{sft_layer.1} parent=11 // pred_check
        %p207 = pneg %p101
      $region14: #{sft_layer.1} parent=11 // pred_check_branch
        %209 = sbr.rel (%p207) target = $region16
      $region15: #{sft_layer.1} parent=11 // pred_region
        _
      $region16: #{sft_layer.1} parent=11 // pred_fallthru
        _
      // Predicated region
      $region17: #{sft_layer.1} parent=11 // pred_check
        %p210 = pneg %p122
      $region18: #{sft_layer.1} parent=11 // pred_check_branch
        %212 = sbr.rel (%p210) target = $region20
      $region19: #{sft_layer.1} parent=11 // pred_region
        _
      $region20: #{sft_layer.1} parent=11 // pred_fallthru
        _
      // Predicated region
      $region21: #{sft_layer.1} parent=11 // pred_check
        %p213 = pneg %p143
      $region22: #{sft_layer.1} parent=11 // pred_check_branch
        %215 = sbr.rel (%p213) target = $region24
      $region23: #{sft_layer.1} parent=11 // pred_region
        _
      $region24: #{sft_layer.1} parent=11 // pred_fallthru
        _
      // Predicated region
      $region25: #{sft_layer.1} parent=11 // pred_check
        %p216 = pneg %p164
      $region26: #{sft_layer.1} parent=11 // pred_check_branch
        %218 = sbr.rel (%p216) target = $region28
      $region27: #{sft_layer.1} parent=11 // pred_region
        _
      $region28: #{sft_layer.1} parent=11 // pred_fallthru
        _
    $region12: #{sft_layer.1} parent=5 // pred_fallthru
      _
    %p219 = scmp.lt.s32.totalorder %s12, 2
    // Predicated region
    $region29: #{sft_layer.1} parent=5 // pred_check
      %p220 = pneg %p219
    $region30: #{sft_layer.1} parent=5 // pred_check_branch
      %222 = sbr.rel (%p220) target = $region32
    $region31: #{sft_layer.1} parent=5 // pred_region
      // Predicated region
      $region33: #{sft_layer.1} parent=31 // pred_check
        %p223 = pneg %p46
      $region34: #{sft_layer.1} parent=31 // pred_check_branch
        %225 = sbr.rel (%p223) target = $region36
      $region35: #{sft_layer.1} parent=31 // pred_region
        %s226 = smul.u32 2, %s20
        %p227 = scmp.lt.s32.totalorder %s19, 1
        %s228 = scalar_select %p227, %s19, 1
        %p229 = scmp.lt.s32.totalorder %s226, 1
        %s230 = scalar_select %p229, %s226, 1
        %s231 = smul.addr %s228, 16
        %s232 = sadd.s32 %s230, %s231
        %s233 = smul.addr %s232, 8
        %s234 = scalar_lea.vmem %s0, %s233
        %s235 = smul.u32 2, %s20
      $region36: #{sft_layer.1} parent=31 // pred_fallthru
        _
      // Predicated region
      $region37: #{sft_layer.1} parent=31 // pred_check
        %p236 = pneg %p74
      $region38: #{sft_layer.1} parent=31 // pred_check_branch
        %238 = sbr.rel (%p236) target = $region40
      $region39: #{sft_layer.1} parent=31 // pred_region
        %s239 = smul.u32 2, %s20
        %p240 = scmp.lt.s32.totalorder %s19, 1
        %s241 = scalar_select %p240, %s19, 1
        %p242 = scmp.lt.s32.totalorder %s239, 1
        %s243 = scalar_select %p242, %s239, 1
        %s244 = smul.addr %s241, 8
        %s245 = sadd.s32 %s243, %s244
        %s246 = smul.addr %s245, 8
        %s247 = scalar_lea.vmem %s1, %s246
        %s248 = smul.u32 2, %s20
      $region40: #{sft_layer.1} parent=31 // pred_fallthru
        _
    $region32: #{sft_layer.1} parent=5 // pred_fallthru
      _
    %p249 = scmp.le.s32.totalorder 1, %s12
    %p250 = scmp.lt.s32.totalorder %s12, 3
    %p251 = pnand %p249, %p250
    %p252 = pneg %p251
    // Predicated region
    $region41: #{sft_layer.1} parent=5 // pred_check
      _
    $region42: #{sft_layer.1} parent=5 // pred_check_branch
      %254 = sbr.rel (%p251) target = $region44
    $region43: #{sft_layer.1} parent=5 // pred_region
      %s255 = ssub.s32 %s12, 1
      %s256 = smul.u32 2, %s22
      %p257 = scmp.lt.s32.totalorder %s21, 1
      %s258 = scalar_select %p257, %s21, 1
      %p259 = scmp.lt.s32.totalorder %s256, 1
      %s260 = scalar_select %p259, %s256, 1
      %s261 = smul.addr %s258, 16
      %s262 = sadd.s32 %s260, %s261
      %s263 = smul.addr %s262, 8
      %s264 = scalar_lea.vmem %s0, %s263
      %p265 = pneg %p52
      %p266 = pneg %p49
      %s267 = smul.u32 2, %s22
      %p268 = scmp.lt.s32.totalorder %s21, 1
      %s269 = scalar_select %p268, %s21, 1
      %p270 = scmp.lt.s32.totalorder %s267, 1
      %s271 = scalar_select %p270, %s267, 1
      %s272 = smul.addr %s269, 8
      %s273 = sadd.s32 %s271, %s272
      %s274 = smul.addr %s273, 8
      %s275 = scalar_lea.vmem %s1, %s274
      %p276 = pneg %p80
      %p277 = pneg %p77
      %p278 = pneg %p101
      %p279 = pneg %p98
      %p280 = pneg %p122
      %p281 = pneg %p119
      %p282 = pneg %p143
      %p283 = pneg %p140
      %p284 = pneg %p164
      %p285 = pneg %p161
      %p286 = pneg %p192
      %p287 = pneg %p189
      %s288 = smul.u32 2, %s22
      %p289 = scmp.lt.s32.totalorder %s21, 1
      %s290 = scalar_select %p289, %s21, 1
      %p291 = scmp.lt.s32.totalorder %s288, 1
      %s292 = scalar_select %p291, %s288, 1
      %s293 = smul.addr %s290, 16
      %s294 = sadd.s32 %s292, %s293
      %s295 = smul.addr %s294, 8
      %s296 = scalar_lea.vmem %s6, %s295
      %s297 = smul.u32 2, %s22
      %p298 = scmp.lt.s32.totalorder %s21, 1
      %s299 = scalar_select %p298, %s21, 1
      %p300 = scmp.lt.s32.totalorder %s297, 1
      %s301 = scalar_select %p300, %s297, 1
      %s302 = smul.addr %s299, 16
      %s303 = sadd.s32 %s301, %s302
      %s304 = smul.addr %s303, 8
      %s305 = scalar_lea.vmem %s0, %s304
      %s306 = smul.u32 2, %s22
      %s307 = smul.u32 2, %s22
      %p308 = scmp.lt.s32.totalorder %s21, 1
      %s309 = scalar_select %p308, %s21, 1
      %p310 = scmp.lt.s32.totalorder %s307, 1
      %s311 = scalar_select %p310, %s307, 1
      %s312 = smul.addr %s309, 8
      %s313 = sadd.s32 %s311, %s312
      %s314 = smul.addr %s313, 8
      %s315 = scalar_lea.vmem %s1, %s314
      %s316 = smul.u32 2, %s22
      %s317 = smul.u32 2, %s22
      %p318 = scmp.lt.s32.totalorder %s21, 1
      %s319 = scalar_select %p318, %s21, 1
      %p320 = scmp.lt.s32.totalorder %s317, 1
      %s321 = scalar_select %p320, %s317, 1
      %s322 = smul.addr %s319, 16
      %s323 = sadd.s32 %s321, %s322
      %s324 = smul.addr %s323, 8
      %s325 = scalar_lea.vmem %s6, %s324
      %s326 = smul.u32 2, %s22
      %v328 = vld [vmem:[%s315] sm:$0xff]
      %v329 = vld [vmem:[%s315 + $0x8] sm:$0xff]
      %v330 = vld [vmem:[%s315 + $0x10] sm:$0xff]
      %v331 = vld [vmem:[%s315 + $0x18] sm:$0xff]
      %v332 = vld [vmem:[%s315 + $0x20] sm:$0xff]
      %v333 = vld [vmem:[%s315 + $0x28] sm:$0xff]
      %v334 = vld [vmem:[%s315 + $0x30] sm:$0xff]
      %v335 = vld [vmem:[%s315 + $0x38] sm:$0xff]
      %v336 = vpack.c.bf16 %v330, %v328
      %v337 = vpack.c.bf16 %v331, %v329
      %v338 = vpack.c.bf16 %v334, %v332
      %v339 = vpack.c.bf16 %v335, %v333
      %v340 = vld [vmem:[%s2] sm:$0xf]
      %v341 = vld [vmem:[%s2 + $0x4] sm:$0xf]
      %v342 = vld [vmem:[%s2 + $0x8] sm:$0xf]
      %v343 = vld [vmem:[%s2 + $0xc] sm:$0xf]
      %v344 = vld [vmem:[%s2 + $0x10] sm:$0xf]
      %v345 = vld [vmem:[%s2 + $0x14] sm:$0xf]
      %v346 = vld [vmem:[%s2 + $0x18] sm:$0xf]
      %v347 = vld [vmem:[%s2 + $0x1c] sm:$0xf]
      %v348 = vld [vmem:[%s3] sm:$0xff]
      %v349 = vld [vmem:[%s3 + $0x8] sm:$0xff]
      %v350 = vld [vmem:[%s3 + $0x10] sm:$0xff]
      %v351 = vld [vmem:[%s3 + $0x18] sm:$0xff]
      %v352 = vld [vmem:[%s3 + $0x20] sm:$0xff]
      %v353 = vld [vmem:[%s3 + $0x28] sm:$0xff]
      %v354 = vld [vmem:[%s3 + $0x30] sm:$0xff]
      %v355 = vld [vmem:[%s3 + $0x38] sm:$0xff]
      %357 = vset.pattern.permute.xlu0 0
      %358 = vperm.xlu0 %357, %v348
      %v359 = vpop.permute.xlu0 %358
      %362 = vset.pattern.permute.xlu0 0
      %363 = vperm.xlu0 %362, %v349
      %v364 = vpop.permute.xlu0 %363
      %367 = vset.pattern.permute.xlu0 0
      %368 = vperm.xlu0 %367, %v350
      %v369 = vpop.permute.xlu0 %368
      %372 = vset.pattern.permute.xlu0 0
      %373 = vperm.xlu0 %372, %v351
      %v374 = vpop.permute.xlu0 %373
      %377 = vset.pattern.permute.xlu0 0
      %378 = vperm.xlu0 %377, %v352
      %v379 = vpop.permute.xlu0 %378
      %382 = vset.pattern.permute.xlu0 0
      %383 = vperm.xlu0 %382, %v353
      %v384 = vpop.permute.xlu0 %383
      %387 = vset.pattern.permute.xlu0 0
      %388 = vperm.xlu0 %387, %v354
      %v389 = vpop.permute.xlu0 %388
      %392 = vset.pattern.permute.xlu0 0
      %393 = vperm.xlu0 %392, %v355
      %v394 = vpop.permute.xlu0 %393
      %v404 = vunpack.c.l.b16 %v340
      %v405 = vunpack.c.l.b16 %v341
      %v406 = vunpack.c.l.b16 %v342
      %v407 = vunpack.c.l.b16 %v343
      %v408 = vunpack.c.l.b16 %v344
      %v409 = vunpack.c.l.b16 %v345
      %v410 = vunpack.c.l.b16 %v346
      %v411 = vunpack.c.l.b16 %v347
      %v412 = vpack.c.b16 %v405, %v404
      %v413 = vpack.c.b16 %v407, %v406
      %v414 = vpack.c.b16 %v409, %v408
      %v415 = vpack.c.b16 %v411, %v410
      %vm416 = vcmask 261120
      %v418 = vsel %vm416, %v412, 0
      %v421 = vsel %vm416, %v413, 0
      %v424 = vsel %vm416, %v414, 0
      %v427 = vsel %vm416, %v415, 0
      %429 = vmatprep.subr.bf16.mxu0 %v337
      %430 = vmatpush1.bf16.msra.mxu0 %v336
      %431 = vmatprep.subr.bf16.mxu0 %v339
      %432 = vmatpush1.bf16.msra.mxu0 %v338
      %433 = vmatprep.subr.bf16.mxu0 0
      %434 = vmatpush1.bf16.msra.mxu0 0
      %435 = vmatprep.subr.bf16.mxu0 0
      %436 = vmatpush1.bf16.msra.mxu0 0
      %437 = vmatprep.subr.bf16.mxu0 0
      %438 = vmatpush1.bf16.msra.mxu0 0
      %439 = vmatprep.subr.bf16.mxu0 0
      %440 = vmatpush1.bf16.msra.mxu0 0
      %441 = vmatprep.subr.bf16.mxu0 0
      %442 = vmatpush1.bf16.msra.mxu0 0
      %443 = vmatprep.subr.bf16.mxu0 0
      %444 = vmatpush1.bf16.msra.mxu0 0
      %445 = vmatprep.subr.bf16.mxu0 0
      %446 = vmatpush1.bf16.msra.mxu0 0
      %447 = vmatprep.subr.bf16.mxu0 0
      %448 = vmatpush1.bf16.msra.mxu0 0
      %449 = vmatprep.subr.bf16.mxu0 0
      %450 = vmatpush1.bf16.msra.mxu0 0
      %451 = vmatprep.subr.bf16.mxu0 0
      %452 = vmatpush1.bf16.msra.mxu0 0
      %453 = vmatprep.subr.bf16.mxu0 0
      %454 = vmatpush1.bf16.msra.mxu0 0
      %455 = vmatprep.subr.bf16.mxu0 0
      %456 = vmatpush1.bf16.msra.mxu0 0
      %457 = vmatprep.subr.bf16.mxu0 0
      %458 = vmatpush1.bf16.msra.mxu0 0
      %459 = vmatprep.subr.bf16.mxu0 0
      %460 = vmatpush1.bf16.msra.mxu0 0
      %461 = vmatprep.mubr.bf16.mxu0 0
      %462 = vmatmul.mubr.bf16.gmra.mrb[0].mxu0 %v418
      %v463 = vpop.f32.mrb[0].mxu0
      %v464 = vadd.f32 %v359, %v463
      %v465 = vpop.f32.mrb[0].mxu0
      %v466 = vadd.f32 %v359, %v465
      %v467 = vpop.f32.mrb[0].mxu0
      %v468 = vadd.f32 %v364, %v467
      %v469 = vpop.f32.mrb[0].mxu0
      %v470 = vadd.f32 %v364, %v469
      %471 = vmatprep.mubr.bf16.mxu0 0
      %472 = vmatmul.mubr.bf16.gmra.mrb[0].mxu0 %v421
      %v473 = vpop.f32.mrb[0].mxu0
      %v474 = vadd.f32 %v369, %v473
      %v475 = vpop.f32.mrb[0].mxu0
      %v476 = vadd.f32 %v369, %v475
      %v477 = vpop.f32.mrb[0].mxu0
      %v478 = vadd.f32 %v374, %v477
      %v479 = vpop.f32.mrb[0].mxu0
      %v480 = vadd.f32 %v374, %v479
      %481 = vmatprep.mubr.bf16.mxu0 0
      %482 = vmatmul.mubr.bf16.gmra.mrb[0].mxu0 %v424
      %v483 = vpop.f32.mrb[0].mxu0
      %v484 = vadd.f32 %v379, %v483
      %v485 = vpop.f32.mrb[0].mxu0
      %v486 = vadd.f32 %v379, %v485
      %v487 = vpop.f32.mrb[0].mxu0
      %v488 = vadd.f32 %v384, %v487
      %v489 = vpop.f32.mrb[0].mxu0
      %v490 = vadd.f32 %v384, %v489
      %491 = vmatprep.mubr.bf16.mxu0 0
      %492 = vmatmul.mubr.bf16.gmra.mrb[0].mxu0 %v427
      %v493 = vpop.f32.mrb[0].mxu0
      %v494 = vadd.f32 %v389, %v493
      %v495 = vpop.f32.mrb[0].mxu0
      %v496 = vadd.f32 %v389, %v495
      %v497 = vpop.f32.mrb[0].mxu0
      %v498 = vadd.f32 %v394, %v497
      %v499 = vpop.f32.mrb[0].mxu0
      %v500 = vadd.f32 %v394, %v499
      %501 = vdwg.mxu0
      %v502 = vmul.f32 %v464, 0.1
      %v503 = vmul.f32 %v466, 0.1
      %v504 = vmul.f32 %v468, 0.1
      %v505 = vmul.f32 %v470, 0.1
      %v506 = vmul.f32 %v474, 0.1
      %v507 = vmul.f32 %v476, 0.1
      %v508 = vmul.f32 %v478, 0.1
      %v509 = vmul.f32 %v480, 0.1
      %v510 = vmul.f32 %v484, 0.1
      %v511 = vmul.f32 %v486, 0.1
      %v512 = vmul.f32 %v488, 0.1
      %v513 = vmul.f32 %v490, 0.1
      %v514 = vmul.f32 %v494, 0.1
      %v515 = vmul.f32 %v496, 0.1
      %v516 = vmul.f32 %v498, 0.1
      %v517 = vmul.f32 %v500, 0.1
      %v518 = vmax.f32 %v464, %v502
      %v519 = vmax.f32 %v466, %v503
      %v520 = vmax.f32 %v468, %v504
      %v521 = vmax.f32 %v470, %v505
      %v522 = vmax.f32 %v474, %v506
      %v523 = vmax.f32 %v476, %v507
      %v524 = vmax.f32 %v478, %v508
      %v525 = vmax.f32 %v480, %v509
      %v526 = vmax.f32 %v484, %v510
      %v527 = vmax.f32 %v486, %v511
      %v528 = vmax.f32 %v488, %v512
      %v529 = vmax.f32 %v490, %v513
      %v530 = vmax.f32 %v494, %v514
      %v531 = vmax.f32 %v496, %v515
      %v532 = vmax.f32 %v498, %v516
      %v533 = vmax.f32 %v500, %v517
      %v534 = vpack.c.bf16 %v520, %v518
      %v535 = vpack.c.bf16 %v521, %v519
      %v536 = vpack.c.bf16 %v524, %v522
      %v537 = vpack.c.bf16 %v525, %v523
      %v538 = vpack.c.bf16 %v528, %v526
      %v539 = vpack.c.bf16 %v529, %v527
      %v540 = vpack.c.bf16 %v532, %v530
      %v541 = vpack.c.bf16 %v533, %v531
      %v542 = vld [vmem:[%s4] sm:$0xf]
      %v543 = vld [vmem:[%s4 + $0x4] sm:$0xf]
      %v544 = vld [vmem:[%s4 + $0x8] sm:$0xf]
      %v545 = vld [vmem:[%s4 + $0xc] sm:$0xf]
      %v546 = vld [vmem:[%s4 + $0x10] sm:$0xf]
      %v547 = vld [vmem:[%s4 + $0x14] sm:$0xf]
      %v548 = vld [vmem:[%s4 + $0x18] sm:$0xf]
      %v549 = vld [vmem:[%s4 + $0x1c] sm:$0xf]
      %v550 = vld [vmem:[%s4 + $0x20] sm:$0xf]
      %v551 = vld [vmem:[%s4 + $0x24] sm:$0xf]
      %v552 = vld [vmem:[%s4 + $0x28] sm:$0xf]
      %v553 = vld [vmem:[%s4 + $0x2c] sm:$0xf]
      %v554 = vld [vmem:[%s4 + $0x30] sm:$0xf]
      %v555 = vld [vmem:[%s4 + $0x34] sm:$0xf]
      %v556 = vld [vmem:[%s4 + $0x38] sm:$0xf]
      %v557 = vld [vmem:[%s4 + $0x3c] sm:$0xf]
      %v558 = vld [vmem:[%s5] sm:$0xff]
      %v559 = vld [vmem:[%s5 + $0x8] sm:$0xff]
      %v560 = vld [vmem:[%s5 + $0x10] sm:$0xff]
      %v561 = vld [vmem:[%s5 + $0x18] sm:$0xff]
      %v562 = vld [vmem:[%s5 + $0x20] sm:$0xff]
      %v563 = vld [vmem:[%s5 + $0x28] sm:$0xff]
      %v564 = vld [vmem:[%s5 + $0x30] sm:$0xff]
      %v565 = vld [vmem:[%s5 + $0x38] sm:$0xff]
      %v566 = vld [vmem:[%s5 + $0x40] sm:$0xff]
      %v567 = vld [vmem:[%s5 + $0x48] sm:$0xff]
      %v568 = vld [vmem:[%s5 + $0x50] sm:$0xff]
      %v569 = vld [vmem:[%s5 + $0x58] sm:$0xff]
      %v570 = vld [vmem:[%s5 + $0x60] sm:$0xff]
      %v571 = vld [vmem:[%s5 + $0x68] sm:$0xff]
      %v572 = vld [vmem:[%s5 + $0x70] sm:$0xff]
      %v573 = vld [vmem:[%s5 + $0x78] sm:$0xff]
      %575 = vset.pattern.permute.xlu0 0
      %576 = vperm.xlu0 %575, %v558
      %v577 = vpop.permute.xlu0 %576
      %580 = vset.pattern.permute.xlu0 0
      %581 = vperm.xlu0 %580, %v559
      %v582 = vpop.permute.xlu0 %581
      %585 = vset.pattern.permute.xlu0 0
      %586 = vperm.xlu0 %585, %v560
      %v587 = vpop.permute.xlu0 %586
      %590 = vset.pattern.permute.xlu0 0
      %591 = vperm.xlu0 %590, %v561
      %v592 = vpop.permute.xlu0 %591
      %595 = vset.pattern.permute.xlu0 0
      %596 = vperm.xlu0 %595, %v562
      %v597 = vpop.permute.xlu0 %596
      %600 = vset.pattern.permute.xlu0 0
      %601 = vperm.xlu0 %600, %v563
      %v602 = vpop.permute.xlu0 %601
      %605 = vset.pattern.permute.xlu0 0
      %606 = vperm.xlu0 %605, %v564
      %v607 = vpop.permute.xlu0 %606
      %610 = vset.pattern.permute.xlu0 0
      %611 = vperm.xlu0 %610, %v565
      %v612 = vpop.permute.xlu0 %611
      %615 = vset.pattern.permute.xlu0 0
      %616 = vperm.xlu0 %615, %v566
      %v617 = vpop.permute.xlu0 %616
      %620 = vset.pattern.permute.xlu0 0
      %621 = vperm.xlu0 %620, %v567
      %v622 = vpop.permute.xlu0 %621
      %625 = vset.pattern.permute.xlu0 0
      %626 = vperm.xlu0 %625, %v568
      %v627 = vpop.permute.xlu0 %626
      %630 = vset.pattern.permute.xlu0 0
      %631 = vperm.xlu0 %630, %v569
      %v632 = vpop.permute.xlu0 %631
      %635 = vset.pattern.permute.xlu0 0
      %636 = vperm.xlu0 %635, %v570
      %v637 = vpop.permute.xlu0 %636
      %640 = vset.pattern.permute.xlu0 0
      %641 = vperm.xlu0 %640, %v571
      %v642 = vpop.permute.xlu0 %641
      %645 = vset.pattern.permute.xlu0 0
      %646 = vperm.xlu0 %645, %v572
      %v647 = vpop.permute.xlu0 %646
      %650 = vset.pattern.permute.xlu0 0
      %651 = vperm.xlu0 %650, %v573
      %v652 = vpop.permute.xlu0 %651
      %v670 = vunpack.c.l.b16 %v542
      %v671 = vunpack.c.l.b16 %v543
      %v672 = vunpack.c.l.b16 %v544
      %v673 = vunpack.c.l.b16 %v545
      %v674 = vunpack.c.l.b16 %v546
      %v675 = vunpack.c.l.b16 %v547
      %v676 = vunpack.c.l.b16 %v548
      %v677 = vunpack.c.l.b16 %v549
      %v678 = vunpack.c.l.b16 %v550
      %v679 = vunpack.c.l.b16 %v551
      %v680 = vunpack.c.l.b16 %v552
      %v681 = vunpack.c.l.b16 %v553
      %v682 = vunpack.c.l.b16 %v554
      %v683 = vunpack.c.l.b16 %v555
      %v684 = vunpack.c.l.b16 %v556
      %v685 = vunpack.c.l.b16 %v557
      %v686 = vpack.c.b16 %v671, %v670
      %v687 = vpack.c.b16 %v673, %v672
      %v688 = vpack.c.b16 %v675, %v674
      %v689 = vpack.c.b16 %v677, %v676
      %v690 = vpack.c.b16 %v679, %v678
      %v691 = vpack.c.b16 %v681, %v680
      %v692 = vpack.c.b16 %v683, %v682
      %v693 = vpack.c.b16 %v685, %v684
      %vm694 = vcmask 523264
      %v696 = vsel %vm694, %v686, 0
      %v699 = vsel %vm694, %v687, 0
      %v702 = vsel %vm694, %v688, 0
      %v705 = vsel %vm694, %v689, 0
      %v708 = vsel %vm694, %v690, 0
      %v711 = vsel %vm694, %v691, 0
      %v714 = vsel %vm694, %v692, 0
      %v717 = vsel %vm694, %v693, 0
      %719 = vmatprep.subr.bf16.mxu0 %v535
      %720 = vmatpush1.bf16.msra.mxu0 %v534
      %721 = vmatprep.subr.bf16.mxu0 %v537
      %722 = vmatpush1.bf16.msra.mxu0 %v536
      %723 = vmatprep.subr.bf16.mxu0 %v539
      %724 = vmatpush1.bf16.msra.mxu0 %v538
      %725 = vmatprep.subr.bf16.mxu0 %v541
      %726 = vmatpush1.bf16.msra.mxu0 %v540
      %727 = vmatprep.subr.bf16.mxu0 0
      %728 = vmatpush1.bf16.msra.mxu0 0
      %729 = vmatprep.subr.bf16.mxu0 0
      %730 = vmatpush1.bf16.msra.mxu0 0
      %731 = vmatprep.subr.bf16.mxu0 0
      %732 = vmatpush1.bf16.msra.mxu0 0
      %733 = vmatprep.subr.bf16.mxu0 0
      %734 = vmatpush1.bf16.msra.mxu0 0
      %735 = vmatprep.subr.bf16.mxu0 0
      %736 = vmatpush1.bf16.msra.mxu0 0
      %737 = vmatprep.subr.bf16.mxu0 0
      %738 = vmatpush1.bf16.msra.mxu0 0
      %739 = vmatprep.subr.bf16.mxu0 0
      %740 = vmatpush1.bf16.msra.mxu0 0
      %741 = vmatprep.subr.bf16.mxu0 0
      %742 = vmatpush1.bf16.msra.mxu0 0
      %743 = vmatprep.subr.bf16.mxu0 0
      %744 = vmatpush1.bf16.msra.mxu0 0
      %745 = vmatprep.subr.bf16.mxu0 0
      %746 = vmatpush1.bf16.msra.mxu0 0
      %747 = vmatprep.subr.bf16.mxu0 0
      %748 = vmatpush1.bf16.msra.mxu0 0
      %749 = vmatprep.subr.bf16.mxu0 0
      %750 = vmatpush1.bf16.msra.mxu0 0
      %751 = vmatprep.mubr.bf16.mxu0 0
      %752 = vmatmul.mubr.bf16.gmra.mrb[0].mxu0 %v696
      %v753 = vpop.f32.mrb[0].mxu0
      %v754 = vadd.f32 %v577, %v753
      %v755 = vpop.f32.mrb[0].mxu0
      %v756 = vadd.f32 %v577, %v755
      %v757 = vpop.f32.mrb[0].mxu0
      %v758 = vadd.f32 %v582, %v757
      %v759 = vpop.f32.mrb[0].mxu0
      %v760 = vadd.f32 %v582, %v759
      %761 = vmatprep.mubr.bf16.mxu0 0
      %762 = vmatmul.mubr.bf16.gmra.mrb[0].mxu0 %v699
      %v763 = vpop.f32.mrb[0].mxu0
      %v764 = vadd.f32 %v587, %v763
      %v765 = vpop.f32.mrb[0].mxu0
      %v766 = vadd.f32 %v587, %v765
      %v767 = vpop.f32.mrb[0].mxu0
      %v768 = vadd.f32 %v592, %v767
      %v769 = vpop.f32.mrb[0].mxu0
      %v770 = vadd.f32 %v592, %v769
      %771 = vmatprep.mubr.bf16.mxu0 0
      %772 = vmatmul.mubr.bf16.gmra.mrb[0].mxu0 %v702
      %v773 = vpop.f32.mrb[0].mxu0
      %v774 = vadd.f32 %v597, %v773
      %v775 = vpop.f32.mrb[0].mxu0
      %v776 = vadd.f32 %v597, %v775
      %v777 = vpop.f32.mrb[0].mxu0
      %v778 = vadd.f32 %v602, %v777
      %v779 = vpop.f32.mrb[0].mxu0
      %v780 = vadd.f32 %v602, %v779
      %781 = vmatprep.mubr.bf16.mxu0 0
      %782 = vmatmul.mubr.bf16.gmra.mrb[0].mxu0 %v705
      %v783 = vpop.f32.mrb[0].mxu0
      %v784 = vadd.f32 %v607, %v783
      %v785 = vpop.f32.mrb[0].mxu0
      %v786 = vadd.f32 %v607, %v785
      %v787 = vpop.f32.mrb[0].mxu0
      %v788 = vadd.f32 %v612, %v787
      %v789 = vpop.f32.mrb[0].mxu0
      %v790 = vadd.f32 %v612, %v789
      %791 = vmatprep.mubr.bf16.mxu0 0
      %792 = vmatmul.mubr.bf16.gmra.mrb[0].mxu0 %v708
      %v793 = vpop.f32.mrb[0].mxu0
      %v794 = vadd.f32 %v617, %v793
      %v795 = vpop.f32.mrb[0].mxu0
      %v796 = vadd.f32 %v617, %v795
      %v797 = vpop.f32.mrb[0].mxu0
      %v798 = vadd.f32 %v622, %v797
      %v799 = vpop.f32.mrb[0].mxu0
      %v800 = vadd.f32 %v622, %v799
      %801 = vmatprep.mubr.bf16.mxu0 0
      %802 = vmatmul.mubr.bf16.gmra.mrb[0].mxu0 %v711
      %v803 = vpop.f32.mrb[0].mxu0
      %v804 = vadd.f32 %v627, %v803
      %v805 = vpop.f32.mrb[0].mxu0
      %v806 = vadd.f32 %v627, %v805
      %v807 = vpop.f32.mrb[0].mxu0
      %v808 = vadd.f32 %v632, %v807
      %v809 = vpop.f32.mrb[0].mxu0
      %v810 = vadd.f32 %v632, %v809
      %811 = vmatprep.mubr.bf16.mxu0 0
      %812 = vmatmul.mubr.bf16.gmra.mrb[0].mxu0 %v714
      %v813 = vpop.f32.mrb[0].mxu0
      %v814 = vadd.f32 %v637, %v813
      %v815 = vpop.f32.mrb[0].mxu0
      %v816 = vadd.f32 %v637, %v815
      %v817 = vpop.f32.mrb[0].mxu0
      %v818 = vadd.f32 %v642, %v817
      %v819 = vpop.f32.mrb[0].mxu0
      %v820 = vadd.f32 %v642, %v819
      %821 = vmatprep.mubr.bf16.mxu0 0
      %822 = vmatmul.mubr.bf16.gmra.mrb[0].mxu0 %v717
      %v823 = vpop.f32.mrb[0].mxu0
      %v824 = vadd.f32 %v647, %v823
      %v825 = vpop.f32.mrb[0].mxu0
      %v826 = vadd.f32 %v647, %v825
      %v827 = vpop.f32.mrb[0].mxu0
      %v828 = vadd.f32 %v652, %v827
      %v829 = vpop.f32.mrb[0].mxu0
      %v830 = vadd.f32 %v652, %v829
      %831 = vdwg.mxu0
      %v832 = vld [vmem:[%s305] sm:$0xff]
      %v833 = vld [vmem:[%s305 + $0x8] sm:$0xff]
      %v834 = vld [vmem:[%s305 + $0x10] sm:$0xff]
      %v835 = vld [vmem:[%s305 + $0x18] sm:$0xff]
      %v836 = vld [vmem:[%s305 + $0x20] sm:$0xff]
      %v837 = vld [vmem:[%s305 + $0x28] sm:$0xff]
      %v838 = vld [vmem:[%s305 + $0x30] sm:$0xff]
      %v839 = vld [vmem:[%s305 + $0x38] sm:$0xff]
      %v840 = vld [vmem:[%s305 + $0x40] sm:$0xff]
      %v841 = vld [vmem:[%s305 + $0x48] sm:$0xff]
      %v842 = vld [vmem:[%s305 + $0x50] sm:$0xff]
      %v843 = vld [vmem:[%s305 + $0x58] sm:$0xff]
      %v844 = vld [vmem:[%s305 + $0x60] sm:$0xff]
      %v845 = vld [vmem:[%s305 + $0x68] sm:$0xff]
      %v846 = vld [vmem:[%s305 + $0x70] sm:$0xff]
      %v847 = vld [vmem:[%s305 + $0x78] sm:$0xff]
      %v848 = vmul.f32 %v832, %v754
      %v849 = vmul.f32 %v833, %v756
      %v850 = vmul.f32 %v834, %v758
      %v851 = vmul.f32 %v835, %v760
      %v852 = vmul.f32 %v836, %v764
      %v853 = vmul.f32 %v837, %v766
      %v854 = vmul.f32 %v838, %v768
      %v855 = vmul.f32 %v839, %v770
      %v856 = vmul.f32 %v840, %v774
      %v857 = vmul.f32 %v841, %v776
      %v858 = vmul.f32 %v842, %v778
      %v859 = vmul.f32 %v843, %v780
      %v860 = vmul.f32 %v844, %v784
      %v861 = vmul.f32 %v845, %v786
      %v862 = vmul.f32 %v846, %v788
      %v863 = vmul.f32 %v847, %v790
      %v864 = vadd.f32 %v848, %v794
      %v865 = vadd.f32 %v849, %v796
      %v866 = vadd.f32 %v850, %v798
      %v867 = vadd.f32 %v851, %v800
      %v868 = vadd.f32 %v852, %v804
      %v869 = vadd.f32 %v853, %v806
      %v870 = vadd.f32 %v854, %v808
      %v871 = vadd.f32 %v855, %v810
      %v872 = vadd.f32 %v856, %v814
      %v873 = vadd.f32 %v857, %v816
      %v874 = vadd.f32 %v858, %v818
      %v875 = vadd.f32 %v859, %v820
      %v876 = vadd.f32 %v860, %v824
      %v877 = vadd.f32 %v861, %v826
      %v878 = vadd.f32 %v862, %v828
      %v879 = vadd.f32 %v863, %v830
      %880 = vst [vmem:[%s325] sm:$0xff] %v864
      %881 = vst [vmem:[%s325 + $0x8] sm:$0xff] %v865
      %882 = vst [vmem:[%s325 + $0x10] sm:$0xff] %v866
      %883 = vst [vmem:[%s325 + $0x18] sm:$0xff] %v867
      %884 = vst [vmem:[%s325 + $0x20] sm:$0xff] %v868
      %885 = vst [vmem:[%s325 + $0x28] sm:$0xff] %v869
      %886 = vst [vmem:[%s325 + $0x30] sm:$0xff] %v870
      %887 = vst [vmem:[%s325 + $0x38] sm:$0xff] %v871
      %888 = vst [vmem:[%s325 + $0x40] sm:$0xff] %v872
      %889 = vst [vmem:[%s325 + $0x48] sm:$0xff] %v873
      %890 = vst [vmem:[%s325 + $0x50] sm:$0xff] %v874
      %891 = vst [vmem:[%s325 + $0x58] sm:$0xff] %v875
      %892 = vst [vmem:[%s325 + $0x60] sm:$0xff] %v876
      %893 = vst [vmem:[%s325 + $0x68] sm:$0xff] %v877
      %894 = vst [vmem:[%s325 + $0x70] sm:$0xff] %v878
      %895 = vst [vmem:[%s325 + $0x78] sm:$0xff] %v879
      %s896 = smul.u32 2, %s22
      %p897 = scmp.lt.s32.totalorder %s21, 1
      %s898 = scalar_select %p897, %s21, 1
      %p899 = scmp.lt.s32.totalorder %s896, 1
      %s900 = scalar_select %p899, %s896, 1
      %s901 = smul.addr %s898, 16
      %s902 = sadd.s32 %s900, %s901
      %s903 = smul.addr %s902, 8
      %s904 = scalar_lea.vmem %s6, %s903
      // Predicated region
      $region45: #{sft_layer.1} parent=43 // pred_check
        %p905 = pneg %p189
      $region46: #{sft_layer.1} parent=43 // pred_check_branch
        %907 = sbr.rel (%p905) target = $region48
      $region47: #{sft_layer.1} parent=43 // pred_region
        %s908 = smul.u32 2, %s22
      $region48: #{sft_layer.1} parent=43 // pred_fallthru
        _
    $region44: #{sft_layer.1} parent=5 // pred_fallthru
      _
    %p909 = scmp.le.s32.totalorder 2, %s12
    // Predicated region
    $region49: #{sft_layer.1} parent=5 // pred_check
      %p910 = pneg %p909
    $region50: #{sft_layer.1} parent=5 // pred_check_branch
      %912 = sbr.rel (%p910) target = $region52
    $region51: #{sft_layer.1} parent=5 // pred_region
      %s913 = ssub.s32 %s12, 2
      // Predicated region
      $region53: #{sft_layer.1} parent=51 // pred_check
        %p914 = pneg %p195
      $region54: #{sft_layer.1} parent=51 // pred_check_branch
        %916 = sbr.rel (%p914) target = $region56
      $region55: #{sft_layer.1} parent=51 // pred_region
        %s917 = smul.u32 2, %s24
        %p918 = scmp.lt.s32.totalorder %s23, 1
        %s919 = scalar_select %p918, %s23, 1
        %p920 = scmp.lt.s32.totalorder %s917, 1
        %s921 = scalar_select %p920, %s917, 1
        %s922 = smul.addr %s919, 16
        %s923 = sadd.s32 %s921, %s922
        %s924 = smul.addr %s923, 8
        %s925 = scalar_lea.vmem %s6, %s924
      $region56: #{sft_layer.1} parent=51 // pred_fallthru
        _
    $region52: #{sft_layer.1} parent=5 // pred_fallthru
      _
  $region6: #{sft_layer.1} parent=0 // loop_footer
    %s16 = sadd.s32 1, %s12
  $region7: #{sft_layer.1} parent=0 // loop_footer_branch
    %11 = sbr.rel target = $region3
  $region8: #{sft_layer.1} parent=0 // loop_exit
    _

</llo_original>
